<compile_context>
chip_gen: v7x
topology: tpu7x:2x2x1
jax: 0.10.0
libtpu: 0.0.40
codegen_flags: <defaults>
</compile_context>

<pallas_src>
import functools

import jax
import jax.numpy as jnp
from jax.experimental import pallas as pl
from jax.experimental.pallas import tpu as pltpu

ROW = 5
COL = 5
IN_FEATURES = ROW * COL   # 25
HIDDEN = 40
OUT_FEATURES = ROW * COL  # 25

_DEFAULT_BATCH_TILE = 1024     # rows of the batch per grid step (multiple of 128)
_SMALL_BATCH_THRESHOLD = 256   # below this, plain jnp beats kernel launch overhead

# TODO(synk): MSELoss / SGD members of `Net` are training-only; only the
# forward pass is implemented here.


def _round_up(n: int, m: int) -> int:
    return ((n + m - 1) // m) * m


def _mlp_kernel_t(xt_ref, w1t_ref, b1_ref, w2t_ref, b2_ref, ot_ref):
    """Transposed fused MLP: y^T = W2^T @ relu(W1^T @ x^T + b1) + b2.

    Shapes per grid step (TB = batch tile, on the lane axis):
      xt_ref : (25, TB)    w1t_ref: (40, 25)   b1_ref: (40, 1)
      w2t_ref: (25, 40)    b2_ref : (25, 1)    ot_ref: (25, TB)
    """
    xt = xt_ref[...]                                                     # (25, TB)
    h = jnp.dot(w1t_ref[...], xt, preferred_element_type=jnp.float32)    # (40, TB)
    h = jnp.maximum(h + b1_ref[...], 0.0)                                # ReLU
    y = jnp.dot(w2t_ref[...], h.astype(w2t_ref.dtype),
                preferred_element_type=jnp.float32)                      # (25, TB)
    ot_ref[...] = (y + b2_ref[...]).astype(ot_ref.dtype)


@functools.partial(jax.jit, static_argnames=("batch_tile", "use_bf16"))
def net_forward_pallas(x, w1, b1, w2, b2, *, batch_tile=_DEFAULT_BATCH_TILE,
                       use_bf16=False):
    """Pallas-backed forward pass of `Net` (always takes the kernel path).

    Args:
      x:  (B, 25) float32
      w1: (25, 40) float32   (transposed w.r.t. PyTorch's (40, 25))
      b1: (40,)   float32
      w2: (40, 25) float32   (transposed w.r.t. PyTorch's (25, 40))
      b2: (25,)   float32
      batch_tile: rows of the batch per grid step; rounded to a multiple of 128.
      use_bf16: cast activations/weights to bf16 (f32 accumulation).  Halves
        input HBM traffic on v6e/v7x; keep False on v5e / for exact f32 math.
    Returns:
      (B, 25) float32
    """
    B = x.shape[0]

    # Tile size: multiple of 128 (lane-dense), no bigger than the padded batch.
    tb = max(128, _round_up(min(batch_tile, max(B, 1)), 128))
    b_padded = _round_up(B, tb)
    num_tiles = b_padded // tb

    act_dtype = jnp.bfloat16 if use_bf16 else jnp.float32

    # Transposed, lane-dense operands (layout plumbing only).
    xt = x.T.astype(act_dtype)                       # (25, B)
    if b_padded != B:
        xt = jnp.pad(xt, ((0, 0), (0, b_padded - B)))
    w1t = w1.T.astype(act_dtype)                     # (40, 25)
    w2t = w2.T.astype(act_dtype)                     # (25, 40)
    b1c = b1.reshape(HIDDEN, 1).astype(jnp.float32)  # (40, 1)
    b2c = b2.reshape(OUT_FEATURES, 1).astype(jnp.float32)

    yt = pl.pallas_call(
        _mlp_kernel_t,
        out_shape=jax.ShapeDtypeStruct((OUT_FEATURES, b_padded), jnp.float32),
        grid=(num_tiles,),
        in_specs=[
            pl.BlockSpec((IN_FEATURES, tb), lambda i: (0, i)),      # x^T tile
            pl.BlockSpec((HIDDEN, IN_FEATURES), lambda i: (0, 0)),  # W1^T (resident)
            pl.BlockSpec((HIDDEN, 1), lambda i: (0, 0)),            # b1   (resident)
            pl.BlockSpec((OUT_FEATURES, HIDDEN), lambda i: (0, 0)), # W2^T (resident)
            pl.BlockSpec((OUT_FEATURES, 1), lambda i: (0, 0)),      # b2   (resident)
        ],
        out_specs=pl.BlockSpec((OUT_FEATURES, tb), lambda i: (0, i)),
        compiler_params=pltpu.CompilerParams(
            dimension_semantics=("parallel",)),
    )(xt, w1t, b1c, w2t, b2c)

    return yt[:, :B].T                                # (B, 25)


@functools.partial(jax.jit, static_argnames=("batch_tile", "use_bf16"))
def net_forward(x, w1, b1, w2, b2, *, batch_tile=_DEFAULT_BATCH_TILE,
                use_bf16=False):
    """Dispatching forward: tiny batches skip the kernel (launch overhead)."""
    if x.shape[0] < _SMALL_BATCH_THRESHOLD:
        return jnp.maximum(x @ w1 + b1, 0.0) @ w2 + b2
    return net_forward_pallas(x, w1, b1, w2, b2,
                              batch_tile=batch_tile, use_bf16=use_bf16)


def init_params(key):
    """Deterministic init mimicking PyTorch nn.Linear default U(-1/sqrt(fan_in), ...)."""
    k1, k2, k3, k4 = jax.random.split(key, 4)
    bound1 = 1.0 / jnp.sqrt(IN_FEATURES)
    bound2 = 1.0 / jnp.sqrt(HIDDEN)
    w1 = jax.random.uniform(k1, (IN_FEATURES, HIDDEN), jnp.float32, -bound1, bound1)
    b1 = jax.random.uniform(k2, (HIDDEN,), jnp.float32, -bound1, bound1)
    w2 = jax.random.uniform(k3, (HIDDEN, OUT_FEATURES), jnp.float32, -bound2, bound2)
    b2 = jax.random.uniform(k4, (OUT_FEATURES,), jnp.float32, -bound2, bound2)
    return w1, b1, w2, b2


if __name__ == "__main__":
    key = jax.random.PRNGKey(0)
    kx, kp = jax.random.split(key)
    w1, b1, w2, b2 = init_params(kp)

    # Small-shape kernel test (forced Pallas path; pads batch 2 -> 128 lanes).
    B = 2
    x = jax.random.normal(kx, (B, IN_FEATURES), jnp.float32)
    out = jax.block_until_ready(net_forward_pallas(x, w1, b1, w2, b2))
    ref = jnp.maximum(x @ w1 + b1, 0.0) @ w2 + b2
    assert out.shape == (B, OUT_FEATURES)
    assert jnp.allclose(out, ref, atol=1e-5, rtol=1e-5)

    # Exercise the multi-tile + tail-padding path (grid=(3,), last tile partial).
    B2 = 300
    x2 = jax.random.normal(kx, (B2, IN_FEATURES), jnp.float32)
    out2 = jax.block_until_ready(
        net_forward_pallas(x2, w1, b1, w2, b2, batch_tile=128))
    ref2 = jnp.maximum(x2 @ w1 + b1, 0.0) @ w2 + b2
    assert out2.shape == (B2, OUT_FEATURES)
    assert jnp.allclose(out2, ref2, atol=1e-5, rtol=1e-5)

    # Dispatcher sanity (tiny batch takes the plain-jnp fast path).
    out3 = jax.block_until_ready(net_forward(x, w1, b1, w2, b2))
    assert jnp.allclose(out3, ref, atol=1e-5, rtol=1e-5)

    print("KERNEL_OK")
</pallas_src>

<mosaic_0001>
module attributes {stable_mosaic.version = 11 : i64} {
  func.func @_mlp_kernel_t(%arg0: i32, %arg1: memref<25x128xf32, #tpu.memory_space<vmem>>, %arg2: memref<40x25xf32, #tpu.memory_space<vmem>>, %arg3: memref<40x1xf32, #tpu.memory_space<vmem>>, %arg4: memref<25x40xf32, #tpu.memory_space<vmem>>, %arg5: memref<25x1xf32, #tpu.memory_space<vmem>>, %arg6: memref<25x128xf32, #tpu.memory_space<vmem>>) attributes {dimension_semantics = [#tpu.dimension_semantics<parallel>], iteration_bounds = array<i64: 1>, scalar_prefetch = 0 : i64, scratch_operands = 0 : i64, tpu.core_type = #tpu.core_type<tc>, window_params = [{transform_indices = @transform_0, window_bounds = array<i64: 25, 128>}, {pipeline_mode = #tpu.pipeline_mode<synchronous>, transform_indices = @transform_1, window_bounds = array<i64: 40, 25>}, {pipeline_mode = #tpu.pipeline_mode<synchronous>, transform_indices = @transform_2, window_bounds = array<i64: 40, 1>}, {pipeline_mode = #tpu.pipeline_mode<synchronous>, transform_indices = @transform_3, window_bounds = array<i64: 25, 40>}, {pipeline_mode = #tpu.pipeline_mode<synchronous>, transform_indices = @transform_4, window_bounds = array<i64: 25, 1>}, {transform_indices = @transform_5, window_bounds = array<i64: 25, 128>}]} {
    %c0 = arith.constant 0 : index
    %c0_0 = arith.constant 0 : index
    %0 = vector.load %arg1[%c0, %c0_0] : memref<25x128xf32, #tpu.memory_space<vmem>>, vector<25x128xf32>
    %c0_1 = arith.constant 0 : index
    %c0_2 = arith.constant 0 : index
    %1 = vector.load %arg2[%c0_1, %c0_2] : memref<40x25xf32, #tpu.memory_space<vmem>>, vector<40x25xf32>
    %cst = arith.constant dense<0.000000e+00> : vector<40x128xf32>
    %2 = tpu.matmul %1, %0, %cst {dimension_numbers = #tpu.dot_dimension_numbers<[1], [0], [0], [1], [0, 0, 1, 1], [], []>} : vector<40x25xf32>, vector<25x128xf32>, vector<40x128xf32> -> vector<40x128xf32>
    %c0_3 = arith.constant 0 : index
    %c0_4 = arith.constant 0 : index
    %3 = vector.load %arg3[%c0_3, %c0_4] : memref<40x1xf32, #tpu.memory_space<vmem>>, vector<40x1xf32>
    %4 = vector.broadcast %3 : vector<40x1xf32> to vector<40x128xf32>
    %5 = arith.addf %2, %4 : vector<40x128xf32>
    %cst_5 = arith.constant 0.000000e+00 : f32
    %6 = vector.broadcast %cst_5 : f32 to vector<40x128xf32>
    %7 = arith.maximumf %5, %6 : vector<40x128xf32>
    %c0_6 = arith.constant 0 : index
    %c0_7 = arith.constant 0 : index
    %8 = vector.load %arg4[%c0_6, %c0_7] : memref<25x40xf32, #tpu.memory_space<vmem>>, vector<25x40xf32>
    %cst_8 = arith.constant dense<0.000000e+00> : vector<25x128xf32>
    %9 = tpu.matmul %8, %7, %cst_8 {dimension_numbers = #tpu.dot_dimension_numbers<[1], [0], [0], [1], [0, 0, 1, 1], [], []>} : vector<25x40xf32>, vector<40x128xf32>, vector<25x128xf32> -> vector<25x128xf32>
    %c0_9 = arith.constant 0 : index
    %c0_10 = arith.constant 0 : index
    %10 = vector.load %arg5[%c0_9, %c0_10] : memref<25x1xf32, #tpu.memory_space<vmem>>, vector<25x1xf32>
    %11 = vector.broadcast %10 : vector<25x1xf32> to vector<25x128xf32>
    %12 = arith.addf %9, %11 : vector<25x128xf32>
    %c0_11 = arith.constant 0 : index
    %c0_12 = arith.constant 0 : index
    %13 = vector.load %arg6[%c0_11, %c0_12] : memref<25x128xf32, #tpu.memory_space<vmem>>, vector<25x128xf32>
    tpu.vector_store %arg6[%c0_11, %c0_12], %12 {strides = array<i32>} : memref<25x128xf32, #tpu.memory_space<vmem>>, vector<25x128xf32>,
    return
  }
  func.func @transform_0(%arg0: i32) -> (i32, i32) {
    %c0_i32 = arith.constant 0 : i32
    %c0_i32_0 = arith.constant 0 : i32
    return %c0_i32, %arg0 : i32, i32
  }
  func.func @transform_1(%arg0: i32) -> (i32, i32) {
    %c0_i32 = arith.constant 0 : i32
    %c0_i32_0 = arith.constant 0 : i32
    %c0_i32_1 = arith.constant 0 : i32
    return %c0_i32, %c0_i32_0 : i32, i32
  }
  func.func @transform_2(%arg0: i32) -> (i32, i32) {
    %c0_i32 = arith.constant 0 : i32
    %c0_i32_0 = arith.constant 0 : i32
    %c0_i32_1 = arith.constant 0 : i32
    return %c0_i32, %c0_i32_0 : i32, i32
  }
  func.func @transform_3(%arg0: i32) -> (i32, i32) {
    %c0_i32 = arith.constant 0 : i32
    %c0_i32_0 = arith.constant 0 : i32
    %c0_i32_1 = arith.constant 0 : i32
    return %c0_i32, %c0_i32_0 : i32, i32
  }
  func.func @transform_4(%arg0: i32) -> (i32, i32) {
    %c0_i32 = arith.constant 0 : i32
    %c0_i32_0 = arith.constant 0 : i32
    %c0_i32_1 = arith.constant 0 : i32
    return %c0_i32, %c0_i32_0 : i32, i32
  }
  func.func @transform_5(%arg0: i32) -> (i32, i32) {
    %c0_i32 = arith.constant 0 : i32
    %c0_i32_0 = arith.constant 0 : i32
    return %c0_i32, %arg0 : i32, i32
  }
}

</mosaic_0001>

<llo_original>
// kernel: net_forward_pallas.1
$region0: #{net_forward_pallas.1}
  #allocation0 [shape = 'u32[]', space=smem, size = 0x4, offset = 0x4, fixed_abs, tag = 'smem constant byte address 0x4 - core index']
  #allocation1 [shape = 'u32[144,128]{1,0:T(1,128)}', space=vmem, size = 0x12000, scoped, tag = 'internal scratch']
  %s0 = inlined_call_operand.vmem [shape: f32[25,128], index: 0, kind: input, shape index: {}]
  %s1 = inlined_call_operand.vmem [shape: f32[40,25], index: 1, kind: input, shape index: {}]
  %s2 = inlined_call_operand.vmem [shape: f32[40,1], index: 2, kind: input, shape index: {}]
  %s3 = inlined_call_operand.vmem [shape: f32[25,40], index: 3, kind: input, shape index: {}]
  %s4 = inlined_call_operand.vmem [shape: f32[25,1], index: 4, kind: input, shape index: {}]
  %s5 = inlined_call_operand.vmem [shape: f32[25,128], index: 5, kind: output, shape index: {}]
  %s6 = sld [smem:[#allocation0]]
  $region30: #{net_forward_pallas.1} parent=0
    _
  %s8 = ssub.s32 1, %s6
  %s9 = scalar_select 0, %s8, %s6
  // Predicated region
  $region2: #{net_forward_pallas.1} parent=0 // pred_check
    _
  $region3: #{net_forward_pallas.1} parent=0 // pred_check_branch
    %11 = sbr.rel (0) target = $region5
  $region4: #{net_forward_pallas.1} parent=0 // pred_region
    _
  $region5: #{net_forward_pallas.1} parent=0 // pred_fallthru
    _
  // Predicated region
  $region6: #{net_forward_pallas.1} parent=0 // pred_check
    _
  $region7: #{net_forward_pallas.1} parent=0 // pred_check_branch
    %13 = sbr.rel (0) target = $region9
  $region8: #{net_forward_pallas.1} parent=0 // pred_region
    _
  $region9: #{net_forward_pallas.1} parent=0 // pred_fallthru
    _
  // Predicated region
  $region10: #{net_forward_pallas.1} parent=0 // pred_check
    _
  $region11: #{net_forward_pallas.1} parent=0 // pred_check_branch
    %15 = sbr.rel (0) target = $region13
  $region12: #{net_forward_pallas.1} parent=0 // pred_region
    _
  $region13: #{net_forward_pallas.1} parent=0 // pred_fallthru
    _
  // Predicated region
  $region14: #{net_forward_pallas.1} parent=0 // pred_check
    _
  $region15: #{net_forward_pallas.1} parent=0 // pred_check_branch
    %17 = sbr.rel (0) target = $region17
  $region16: #{net_forward_pallas.1} parent=0 // pred_region
    _
  $region17: #{net_forward_pallas.1} parent=0 // pred_fallthru
    _
  // Predicated region
  $region18: #{net_forward_pallas.1} parent=0 // pred_check
    _
  $region19: #{net_forward_pallas.1} parent=0 // pred_check_branch
    %19 = sbr.rel (0) target = $region21
  $region20: #{net_forward_pallas.1} parent=0 // pred_region
    _
  $region21: #{net_forward_pallas.1} parent=0 // pred_fallthru
    _
  %v20 = vld [vmem:[%s0] sm:$0xff]
  %v21 = vld [vmem:[%s0 + $0x8] sm:$0xff]
  %v22 = vld [vmem:[%s0 + $0x10] sm:$0xff]
  %v23 = vld [vmem:[%s0 + $0x18] sm:$0x1]
  %v24 = vld [vmem:[%s1] sm:$0xff]
  %v25 = vld [vmem:[%s1 + $0x8] sm:$0xff]
  %v26 = vld [vmem:[%s1 + $0x10] sm:$0xff]
  %v27 = vld [vmem:[%s1 + $0x18] sm:$0xff]
  %v28 = vld [vmem:[%s1 + $0x20] sm:$0xff]
  %v29 = vld [vmem:[%s2] sm:$0xff]
  %v30 = vld [vmem:[%s2 + $0x8] sm:$0xff]
  %v31 = vld [vmem:[%s2 + $0x10] sm:$0xff]
  %v32 = vld [vmem:[%s2 + $0x18] sm:$0xff]
  %v33 = vld [vmem:[%s2 + $0x20] sm:$0xff]
  %35 = vset.pattern.permute.xlu0 0
  %36 = vperm.xlu0 %35, %v29
  %v37 = vpop.permute.xlu0 %36
  %40 = vset.pattern.permute.xlu0 0
  %41 = vperm.xlu0 %40, %v30
  %v42 = vpop.permute.xlu0 %41
  %45 = vset.pattern.permute.xlu0 0
  %46 = vperm.xlu0 %45, %v31
  %v47 = vpop.permute.xlu0 %46
  %50 = vset.pattern.permute.xlu0 0
  %51 = vperm.xlu0 %50, %v32
  %v52 = vpop.permute.xlu0 %51
  %55 = vset.pattern.permute.xlu0 0
  %56 = vperm.xlu0 %55, %v33
  %v57 = vpop.permute.xlu0 %56
  %vm59 = vcmask 203776
  %v61 = vsel %vm59, %v24, 0
  %v64 = vsel %vm59, %v25, 0
  %v67 = vsel %vm59, %v26, 0
  %v70 = vsel %vm59, %v27, 0
  %v73 = vsel %vm59, %v28, 0
  %vm75 = vcmask 1040384
  %v77 = vsel %vm75, %v23, 0
  %79 = vmatprep.subr.mxu0 0.0
  %80 = vmatpush1.msra.mxu0 %v20
  %81 = vmatprep.subr.mxu0 0.0
  %82 = vmatpush1.msra.mxu0 %v21
  %83 = vmatprep.subr.mxu0 0.0
  %84 = vmatpush1.msra.mxu0 %v22
  %85 = vmatprep.subr.mxu0 0.0
  %86 = vmatpush1.msra.mxu0 %v77
  %87 = vmatprep.subr.mxu0 0.0
  %88 = vmatpush1.msra.mxu0 0.0
  %89 = vmatprep.subr.mxu0 0.0
  %90 = vmatpush1.msra.mxu0 0.0
  %91 = vmatprep.subr.mxu0 0.0
  %92 = vmatpush1.msra.mxu0 0.0
  %93 = vmatprep.subr.mxu0 0.0
  %94 = vmatpush1.msra.mxu0 0.0
  %95 = vmatprep.subr.mxu0 0.0
  %96 = vmatpush1.msra.mxu0 0.0
  %97 = vmatprep.subr.mxu0 0.0
  %98 = vmatpush1.msra.mxu0 0.0
  %99 = vmatprep.subr.mxu0 0.0
  %100 = vmatpush1.msra.mxu0 0.0
  %101 = vmatprep.subr.mxu0 0.0
  %102 = vmatpush1.msra.mxu0 0.0
  %103 = vmatprep.subr.mxu0 0.0
  %104 = vmatpush1.msra.mxu0 0.0
  %105 = vmatprep.subr.mxu0 0.0
  %106 = vmatpush1.msra.mxu0 0.0
  %107 = vmatprep.subr.mxu0 0.0
  %108 = vmatpush1.msra.mxu0 0.0
  %109 = vmatprep.subr.mxu0 0.0
  %110 = vmatpush1.msra.mxu0 0.0
  %111 = vmatprep.subr.mxu0 0.0
  %112 = vmatpush1.msra.mxu0 0.0
  %113 = vmatprep.subr.mxu0 0.0
  %114 = vmatpush1.msra.mxu0 0.0
  %115 = vmatprep.subr.mxu0 0.0
  %116 = vmatpush1.msra.mxu0 0.0
  %117 = vmatprep.subr.mxu0 0.0
  %118 = vmatpush1.msra.mxu0 0.0
  %119 = vmatprep.subr.mxu0 0.0
  %120 = vmatpush1.msra.mxu0 0.0
  %121 = vmatprep.subr.mxu0 0.0
  %122 = vmatpush1.msra.mxu0 0.0
  %123 = vmatprep.subr.mxu0 0.0
  %124 = vmatpush1.msra.mxu0 0.0
  %125 = vmatprep.subr.mxu0 0.0
  %126 = vmatpush1.msra.mxu0 0.0
  %127 = vmatprep.subr.mxu0 0.0
  %128 = vmatpush1.msra.mxu0 0.0
  %129 = vmatprep.subr.mxu0 0.0
  %130 = vmatpush1.msra.mxu0 0.0
  %131 = vmatprep.subr.mxu0 0.0
  %132 = vmatpush1.msra.mxu0 0.0
  %133 = vmatprep.subr.mxu0 0.0
  %134 = vmatpush1.msra.mxu0 0.0
  %135 = vmatprep.subr.mxu0 0.0
  %136 = vmatpush1.msra.mxu0 0.0
  %137 = vmatprep.subr.mxu0 0.0
  %138 = vmatpush1.msra.mxu0 0.0
  %139 = vmatprep.subr.mxu0 0.0
  %140 = vmatpush1.msra.mxu0 0.0
  %141 = vmatprep.subr.mxu0 0.0
  %142 = vmatpush1.msra.mxu0 0.0
  %143 = vmatprep.mubr.f32.mxu0 0.0
  %144 = vmatmul.mubr.f32.gmra.mrb[0].mxu0 %v61
  %v145 = vpop.f32.mrb[0].mxu0
  %v146 = vadd.f32 %v37, %v145
  %v147 = vpop.f32.mrb[0].mxu0
  %148 = vmatprep.mubr.f32.mxu0 0.0
  %149 = vmatmul.mubr.f32.gmra.mrb[0].mxu0 %v64
  %v150 = vpop.f32.mrb[0].mxu0
  %v151 = vadd.f32 %v42, %v150
  %v152 = vpop.f32.mrb[0].mxu0
  %153 = vmatprep.mubr.f32.mxu0 0.0
  %154 = vmatmul.mubr.f32.gmra.mrb[0].mxu0 %v67
  %v155 = vpop.f32.mrb[0].mxu0
  %v156 = vadd.f32 %v47, %v155
  %v157 = vpop.f32.mrb[0].mxu0
  %158 = vmatprep.mubr.f32.mxu0 0.0
  %159 = vmatmul.mubr.f32.gmra.mrb[0].mxu0 %v70
  %v160 = vpop.f32.mrb[0].mxu0
  %v161 = vadd.f32 %v52, %v160
  %v162 = vpop.f32.mrb[0].mxu0
  %163 = vmatprep.mubr.f32.mxu0 0.0
  %164 = vmatmul.mubr.f32.gmra.mrb[0].mxu0 %v73
  %v165 = vpop.f32.mrb[0].mxu0
  %v166 = vadd.f32 %v57, %v165
  %v167 = vpop.f32.mrb[0].mxu0
  %168 = vdwg.mxu0
  %v169 = vmax.f32 %v146, 0.0
  %v170 = vmax.f32 %v151, 0.0
  %v171 = vmax.f32 %v156, 0.0
  %v172 = vmax.f32 %v161, 0.0
  %v173 = vmax.f32 %v166, 0.0
  %v174 = vld [vmem:[%s3] sm:$0xff]
  %v175 = vld [vmem:[%s3 + $0x8] sm:$0xff]
  %v176 = vld [vmem:[%s3 + $0x10] sm:$0xff]
  %v177 = vld [vmem:[%s3 + $0x18] sm:$0x1]
  %v178 = vld [vmem:[%s4] sm:$0xff]
  %v179 = vld [vmem:[%s4 + $0x8] sm:$0xff]
  %v180 = vld [vmem:[%s4 + $0x10] sm:$0xff]
  %v181 = vld [vmem:[%s4 + $0x18] sm:$0x1]
  %183 = vset.pattern.permute.xlu0 0
  %184 = vperm.xlu0 %183, %v178
  %v185 = vpop.permute.xlu0 %184
  %188 = vset.pattern.permute.xlu0 0
  %189 = vperm.xlu0 %188, %v179
  %v190 = vpop.permute.xlu0 %189
  %193 = vset.pattern.permute.xlu0 0
  %194 = vperm.xlu0 %193, %v180
  %v195 = vpop.permute.xlu0 %194
  %198 = vset.pattern.permute.xlu0 0
  %199 = vperm.xlu0 %198, %v181
  %v200 = vpop.permute.xlu0 %199
  %vm202 = vcmask 326656
  %v204 = vsel %vm202, %v174, 0
  %v207 = vsel %vm202, %v175, 0
  %v210 = vsel %vm202, %v176, 0
  %v213 = vsel %vm202, %v177, 0
  %215 = vmatprep.subr.mxu0 0.0
  %216 = vmatpush1.msra.mxu0 %v169
  %217 = vmatprep.subr.mxu0 0.0
  %218 = vmatpush1.msra.mxu0 %v170
  %219 = vmatprep.subr.mxu0 0.0
  %220 = vmatpush1.msra.mxu0 %v171
  %221 = vmatprep.subr.mxu0 0.0
  %222 = vmatpush1.msra.mxu0 %v172
  %223 = vmatprep.subr.mxu0 0.0
  %224 = vmatpush1.msra.mxu0 %v173
  %225 = vmatprep.subr.mxu0 0.0
  %226 = vmatpush1.msra.mxu0 0.0
  %227 = vmatprep.subr.mxu0 0.0
  %228 = vmatpush1.msra.mxu0 0.0
  %229 = vmatprep.subr.mxu0 0.0
  %230 = vmatpush1.msra.mxu0 0.0
  %231 = vmatprep.subr.mxu0 0.0
  %232 = vmatpush1.msra.mxu0 0.0
  %233 = vmatprep.subr.mxu0 0.0
  %234 = vmatpush1.msra.mxu0 0.0
  %235 = vmatprep.subr.mxu0 0.0
  %236 = vmatpush1.msra.mxu0 0.0
  %237 = vmatprep.subr.mxu0 0.0
  %238 = vmatpush1.msra.mxu0 0.0
  %239 = vmatprep.subr.mxu0 0.0
  %240 = vmatpush1.msra.mxu0 0.0
  %241 = vmatprep.subr.mxu0 0.0
  %242 = vmatpush1.msra.mxu0 0.0
  %243 = vmatprep.subr.mxu0 0.0
  %244 = vmatpush1.msra.mxu0 0.0
  %245 = vmatprep.subr.mxu0 0.0
  %246 = vmatpush1.msra.mxu0 0.0
  %247 = vmatprep.subr.mxu0 0.0
  %248 = vmatpush1.msra.mxu0 0.0
  %249 = vmatprep.subr.mxu0 0.0
  %250 = vmatpush1.msra.mxu0 0.0
  %251 = vmatprep.subr.mxu0 0.0
  %252 = vmatpush1.msra.mxu0 0.0
  %253 = vmatprep.subr.mxu0 0.0
  %254 = vmatpush1.msra.mxu0 0.0
  %255 = vmatprep.subr.mxu0 0.0
  %256 = vmatpush1.msra.mxu0 0.0
  %257 = vmatprep.subr.mxu0 0.0
  %258 = vmatpush1.msra.mxu0 0.0
  %259 = vmatprep.subr.mxu0 0.0
  %260 = vmatpush1.msra.mxu0 0.0
  %261 = vmatprep.subr.mxu0 0.0
  %262 = vmatpush1.msra.mxu0 0.0
  %263 = vmatprep.subr.mxu0 0.0
  %264 = vmatpush1.msra.mxu0 0.0
  %265 = vmatprep.subr.mxu0 0.0
  %266 = vmatpush1.msra.mxu0 0.0
  %267 = vmatprep.subr.mxu0 0.0
  %268 = vmatpush1.msra.mxu0 0.0
  %269 = vmatprep.subr.mxu0 0.0
  %270 = vmatpush1.msra.mxu0 0.0
  %271 = vmatprep.subr.mxu0 0.0
  %272 = vmatpush1.msra.mxu0 0.0
  %273 = vmatprep.subr.mxu0 0.0
  %274 = vmatpush1.msra.mxu0 0.0
  %275 = vmatprep.subr.mxu0 0.0
  %276 = vmatpush1.msra.mxu0 0.0
  %277 = vmatprep.subr.mxu0 0.0
  %278 = vmatpush1.msra.mxu0 0.0
  %279 = vmatprep.mubr.f32.mxu0 0.0
  %280 = vmatmul.mubr.f32.gmra.mrb[0].mxu0 %v204
  %v281 = vpop.f32.mrb[0].mxu0
  %v282 = vadd.f32 %v185, %v281
  %v283 = vpop.f32.mrb[0].mxu0
  %284 = vmatprep.mubr.f32.mxu0 0.0
  %285 = vmatmul.mubr.f32.gmra.mrb[0].mxu0 %v207
  %v286 = vpop.f32.mrb[0].mxu0
  %v287 = vadd.f32 %v190, %v286
  %v288 = vpop.f32.mrb[0].mxu0
  %289 = vmatprep.mubr.f32.mxu0 0.0
  %290 = vmatmul.mubr.f32.gmra.mrb[0].mxu0 %v210
  %v291 = vpop.f32.mrb[0].mxu0
  %v292 = vadd.f32 %v195, %v291
  %v293 = vpop.f32.mrb[0].mxu0
  %294 = vmatprep.mubr.f32.mxu0 0.0
  %295 = vmatmul.mubr.f32.gmra.mrb[0].mxu0 %v213
  %v296 = vpop.f32.mrb[0].mxu0
  %v297 = vadd.f32 %v200, %v296
  %v298 = vpop.f32.mrb[0].mxu0
  %299 = vdwg.mxu0
  %300 = vst [vmem:[%s5] sm:$0xff] %v282
  %301 = vst [vmem:[%s5 + $0x8] sm:$0xff] %v287
  %302 = vst [vmem:[%s5 + $0x10] sm:$0xff] %v292
  %303 = vst [vmem:[%s5 + $0x18] sm:$0x1] %v297
  // Predicated region
  $region22: #{net_forward_pallas.1} parent=0 // pred_check
    _
  $region23: #{net_forward_pallas.1} parent=0 // pred_check_branch
    %305 = sbr.rel (0) target = $region25
  $region24: #{net_forward_pallas.1} parent=0 // pred_region
    _
  $region25: #{net_forward_pallas.1} parent=0 // pred_fallthru
    _
  // Predicated region
  $region26: #{net_forward_pallas.1} parent=0 // pred_check
    _
  $region27: #{net_forward_pallas.1} parent=0 // pred_check_branch
    %307 = sbr.rel (0) target = $region29
  $region28: #{net_forward_pallas.1} parent=0 // pred_region
    _
  $region29: #{net_forward_pallas.1} parent=0 // pred_fallthru
    _

</llo_original>
